<compile_context>
chip_gen: v7x
topology: tpu7x:2x2x1
jax: 0.10.0
libtpu: 0.0.40
codegen_flags: <defaults>
</compile_context>

<pallas_src>
import functools

import jax
import jax.numpy as jnp
from jax.experimental import pallas as pl
from jax.experimental.pallas import tpu as pltpu


def fc_kernel(x_ref, w1_ref, bias_ref, wfc1_ref, wfc2_ref, out_ref,
              xb_ref, yb_ref, pooled_ref, *,
              nb: int, hw: int, residual: bool, matmul_dtype):
    """One grid step processes `nb` images; channels on sublanes, HW on lanes.

    x_ref      : (nb, Cin, HW)    input block (f32 or bf16)
    w1_ref     : (Cout, Cin)      1x1 conv weight with BN scale folded in
    bias_ref   : (Cout, 1)        folded BatchNorm bias (f32)
    wfc1_ref   : (Cr, Cout)       ChannelAttention fc1 weight (f32)
    wfc2_ref   : (Cout, Cr)       ChannelAttention fc2 weight (f32)
    out_ref    : (nb, Cout, HW)   output block
    xb_ref     : (Cin, nb*HW)     scratch: lane-concatenated input block
    yb_ref     : (Cout, nb*HW)    scratch: conv + BN result (f32)
    pooled_ref : (Cout, 2*nb)     scratch: [avg columns | max columns]
    """
    # ---- Pass 0: gather the block into one lane-wide (Cin, nb*HW) matrix. --
    # Each copy is (8,128)-tile aligned (HW is a multiple of 128); nothing is
    # carried across iterations, so the static unroll keeps vregs flat.
    for n in range(nb):
        xb_ref[:, n * hw:(n + 1) * hw] = x_ref[n].astype(matmul_dtype)

    # ---- Pass 1: ONE fused 1x1-conv matmul for the whole block, + BN bias. -
    yb_ref[...] = (
        jnp.dot(w1_ref[...], xb_ref[...], preferred_element_type=jnp.float32)
        + bias_ref[...])

    # ---- Pooled avg/max over HW, written lane-aligned (no concatenate). ----
    inv_hw = 1.0 / hw
    for n in range(nb):
        y_n = yb_ref[:, n * hw:(n + 1) * hw]                  # (Cout, HW)
        pooled_ref[:, n:n + 1] = jnp.sum(y_n, axis=1, keepdims=True) * inv_hw
        pooled_ref[:, nb + n:nb + n + 1] = jnp.max(y_n, axis=1, keepdims=True)

    # ---- Fused squeeze-excite for both branches of all nb images. ----------
    pooled = pooled_ref[...]                                   # (Cout, 2*nb)
    h = jnp.maximum(
        jnp.dot(wfc1_ref[...], pooled, preferred_element_type=jnp.float32),
        0.0)                                                   # (Cr, 2*nb)
    s = jnp.dot(wfc2_ref[...], h, preferred_element_type=jnp.float32)
    att = jax.nn.sigmoid(s[:, :nb] + s[:, nb:2 * nb])          # (Cout, nb)

    # ---- Pass 2: apply attention (+ optional residual ReLU) and store. -----
    for n in range(nb):
        o = yb_ref[:, n * hw:(n + 1) * hw] * att[:, n:n + 1]   # (Cout, HW)
        if residual:  # static: inplanes == planes
            o = jnp.maximum(x_ref[n].astype(jnp.float32) + o, 0.0)
        out_ref[n] = o.astype(out_ref.dtype)


def _chip_config():
    """(multi_tensorcore, usable scoped-VMEM cap in bytes) for the local chip."""
    kind = ""
    try:
        kind = jax.devices()[0].device_kind.lower()
    except Exception:
        pass
    gen = 0
    for g in (7, 6, 5, 4, 3):
        if (f"v{g}" in kind) or (f"tpu{g}" in kind):
            gen = g
            break
    # Chips with >1 TensorCore per chip (v7x dual-TC, v4/v5p megacore) need a
    # grid with >=2 steps to keep both cores busy.  Unknown -> conservative.
    multi_tc = (gen >= 7) or (gen == 4) or ("v5p" in kind) or (gen == 0)

    phys = 64 << 20
    try:
        phys = int(pltpu.get_tpu_info().vmem_capacity_bytes)
    except Exception:
        pass
    if gen >= 7 or gen == 0 or phys <= (64 << 20):
        cap = 40 << 20          # v7x: 64 MiB per TC -> leave headroom
    else:
        cap = 64 << 20          # v5e / v6e: 128 MiB physical VMEM
    return multi_tc, cap


def _choose_block_n(n, cin, cout, hw, *, in_itemsize, out_itemsize,
                    mm_itemsize, multi_tc, vmem_budget, max_block=64):
    """Biggest block (in images) that fits the VMEM budget.

    Targets a few MB of HBM traffic per grid step (the kernel is HBM-bound, so
    large steps amortize the per-step pipeline overhead).  On dual-TC chips
    the grid is kept >= 2 steps so both TensorCores stay busy.
    """
    nb = max(1, min(max_block, n))
    if multi_tc and n >= 2:
        nb = min(nb, pl.cdiv(n, 2))

    def vmem_need(b):
        blk = b * hw * (cin * in_itemsize + cout * out_itemsize)     # in + out
        scratch = b * hw * (cin * mm_itemsize + cout * 4) + 2 * b * cout * 4
        return 2 * blk + scratch                                     # 2x: dbl-buf

    while nb > 1 and vmem_need(nb) > vmem_budget:
        nb -= 1
    return nb


def fc_forward(x_nchw, w1, gamma, beta, run_mean, run_var, wfc1, wfc2,
               eps=1e-5, matmul_dtype=jnp.float32, out_dtype=jnp.float32,
               block_n=None):
    """FC.forward. x_nchw: (N, Cin, H, W). Returns (N, Cout, H, W) in out_dtype.

    Weight layouts are the native PyTorch ones:
      w1: (Cout, Cin), wfc1: (Cr, Cout), wfc2: (Cout, Cr).
    On v5e, pass matmul_dtype=jnp.bfloat16 (and optionally bf16 x / out_dtype)
    to ride the bf16-native MXU and halve HBM traffic; accumulation stays f32.
    """
    N, Cin, H, W = x_nchw.shape
    Cout = w1.shape[0]
    Cr = wfc1.shape[0]
    HW = H * W

    # NCHW -> (N, Cin, HW): a pure reshape, no transpose / extra HBM traffic.
    x = x_nchw.reshape(N, Cin, HW)

    # Fold BatchNorm (eval mode) into the conv weight and a per-channel bias.
    inv_std = 1.0 / jnp.sqrt(run_var.astype(jnp.float32) + eps)
    scale = gamma.astype(jnp.float32) * inv_std                        # (Cout,)
    bias = (beta.astype(jnp.float32)
            - run_mean.astype(jnp.float32) * scale).reshape(Cout, 1)
    w1_eff = (w1.astype(jnp.float32) * scale[:, None]).astype(matmul_dtype)

    residual = (Cin == Cout)

    multi_tc, vmem_cap = _chip_config()
    if block_n is not None:
        nb = int(block_n)
    else:
        nb = _choose_block_n(
            N, Cin, Cout, HW,
            in_itemsize=x.dtype.itemsize,
            out_itemsize=jnp.dtype(out_dtype).itemsize,
            mm_itemsize=jnp.dtype(matmul_dtype).itemsize,
            multi_tc=multi_tc,
            vmem_budget=max(vmem_cap - (8 << 20), 8 << 20))

    # Pad the batch so every grid step gets a full block; padded images are
    # fully independent and sliced off afterwards (no masking needed).
    grid = pl.cdiv(N, nb)
    n_pad = grid * nb
    if n_pad != N:
        x = jnp.pad(x, ((0, n_pad - N), (0, 0), (0, 0)))

    kernel = functools.partial(fc_kernel, nb=nb, hw=HW, residual=residual,
                               matmul_dtype=matmul_dtype)

    blk_bytes = (nb * Cin * HW * x.dtype.itemsize
                 + nb * Cout * HW * jnp.dtype(out_dtype).itemsize)
    scratch_bytes = (nb * Cin * HW * jnp.dtype(matmul_dtype).itemsize
                     + nb * Cout * HW * 4 + 2 * nb * Cout * 4)
    weight_bytes = (Cout * Cin * jnp.dtype(matmul_dtype).itemsize
                    + Cout * 4 + 2 * Cr * Cout * 4)
    vmem_need = 2 * blk_bytes + scratch_bytes + 2 * weight_bytes
    vmem_limit = int(min(vmem_cap, vmem_need + (8 << 20)))

    cost = pl.CostEstimate(
        flops=int(2 * n_pad * HW * Cin * Cout + 5 * n_pad * HW * Cout
                  + 8 * n_pad * Cr * Cout),
        transcendentals=int(n_pad * Cout),
        bytes_accessed=int(n_pad * Cin * HW * x.dtype.itemsize
                           + n_pad * Cout * HW * jnp.dtype(out_dtype).itemsize
                           + weight_bytes),
    )

    out = pl.pallas_call(
        kernel,
        out_shape=jax.ShapeDtypeStruct((n_pad, Cout, HW), out_dtype),
        grid_spec=pltpu.PrefetchScalarGridSpec(
            num_scalar_prefetch=0,
            grid=(grid,),
            in_specs=[
                pl.BlockSpec((nb, Cin, HW), lambda i: (i, 0, 0)),
                pl.BlockSpec((Cout, Cin), lambda i: (0, 0)),
                pl.BlockSpec((Cout, 1), lambda i: (0, 0)),
                pl.BlockSpec((Cr, Cout), lambda i: (0, 0)),
                pl.BlockSpec((Cout, Cr), lambda i: (0, 0)),
            ],
            out_specs=pl.BlockSpec((nb, Cout, HW), lambda i: (i, 0, 0)),
            scratch_shapes=[
                pltpu.VMEM((Cin, nb * HW), matmul_dtype),   # xb: gathered input
                pltpu.VMEM((Cout, nb * HW), jnp.float32),   # yb: conv+BN result
                pltpu.VMEM((Cout, 2 * nb), jnp.float32),    # pooled avg|max
            ],
        ),
        compiler_params=pltpu.CompilerParams(
            dimension_semantics=("parallel",),
            vmem_limit_bytes=vmem_limit),
        cost_estimate=cost,
    )(x, w1_eff, bias, wfc1.astype(jnp.float32), wfc2.astype(jnp.float32))

    if n_pad != N:
        out = out[:N]
    # (N, Cout, HW) -> (N, Cout, H, W): pure reshape, no transpose.
    return out.reshape(N, Cout, H, W)


def fc_reference(x_nchw, w1, gamma, beta, run_mean, run_var, wfc1, wfc2,
                 eps=1e-5):
    """Pure-JAX reference mirroring the PyTorch forward (NCHW, eval-mode BN)."""
    N, Cin, H, W = x_nchw.shape
    Cout = w1.shape[0]
    y = jnp.einsum("oc,nchw->nohw", w1, x_nchw)
    y = (y - run_mean[None, :, None, None]) / jnp.sqrt(
        run_var[None, :, None, None] + eps)
    y = y * gamma[None, :, None, None] + beta[None, :, None, None]
    avg = jnp.mean(y, axis=(2, 3))
    mxp = jnp.max(y, axis=(2, 3))

    def se(v):
        h = jnp.maximum(v @ wfc1.T, 0.0)
        return h @ wfc2.T

    att = jax.nn.sigmoid(se(avg) + se(mxp))
    out = y * att[:, :, None, None]
    if Cin == Cout:
        out = jnp.maximum(x_nchw + out, 0.0)
    return out


if __name__ == "__main__":
    # FC(inplanes=32, planes=32), ratio=16 -> Cr=2; H=W=16 so HW=256 (lane dense)
    N, Cin, H, W = 2, 32, 16, 16
    Cout = 32
    Cr = Cout // 16

    key = jax.random.PRNGKey(0)
    k = jax.random.split(key, 8)

    x = jax.random.normal(k[0], (N, Cin, H, W), dtype=jnp.float32)

    # Parameters in PyTorch-native layouts.
    w1 = jax.random.normal(k[1], (Cout, Cin), dtype=jnp.float32) * 0.1
    gamma = jax.random.normal(k[2], (Cout,), dtype=jnp.float32) * 0.1 + 1.0
    beta = jax.random.normal(k[3], (Cout,), dtype=jnp.float32) * 0.1
    run_mean = jax.random.normal(k[4], (Cout,), dtype=jnp.float32) * 0.1
    run_var = jnp.abs(jax.random.normal(k[5], (Cout,), dtype=jnp.float32)) + 0.5
    wfc1 = jax.random.normal(k[6], (Cr, Cout), dtype=jnp.float32) * 0.1
    wfc2 = jax.random.normal(k[7], (Cout, Cr), dtype=jnp.float32) * 0.1

    ref = fc_reference(x, w1, gamma, beta, run_mean, run_var, wfc1, wfc2)

    # f32 path (strict check).
    out = fc_forward(x, w1, gamma, beta, run_mean, run_var, wfc1, wfc2)
    out = jax.block_until_ready(out)
    assert out.shape == (N, Cout, H, W)
    assert jnp.allclose(out, ref, atol=1e-4, rtol=1e-4), (
        float(jnp.max(jnp.abs(out - ref))))

    # bf16 I/O + bf16 matmul-operand path (halves HBM traffic; f32 accumulate
    # and f32 BN/attention math stay inside the kernel).  Loose check.
    out_bf16 = fc_forward(x.astype(jnp.bfloat16), w1, gamma, beta, run_mean,
                          run_var, wfc1, wfc2,
                          matmul_dtype=jnp.bfloat16, out_dtype=jnp.bfloat16)
    out_bf16 = jax.block_until_ready(out_bf16).astype(jnp.float32)
    assert jnp.allclose(out_bf16, ref, atol=1e-1, rtol=1e-1), (
        float(jnp.max(jnp.abs(out_bf16 - ref))))

    # Non-divisible batch exercises the cdiv + padding path.
    x3 = jax.random.normal(k[0], (3, Cin, H, W), dtype=jnp.float32)
    ref3 = fc_reference(x3, w1, gamma, beta, run_mean, run_var, wfc1, wfc2)
    out3 = fc_forward(x3, w1, gamma, beta, run_mean, run_var, wfc1, wfc2,
                      block_n=2)
    out3 = jax.block_until_ready(out3)
    assert jnp.allclose(out3, ref3, atol=1e-4, rtol=1e-4), (
        float(jnp.max(jnp.abs(out3 - ref3))))

    print("KERNEL_OK")
</pallas_src>

<mosaic_0001>
module attributes {stable_mosaic.version = 11 : i64} {
  func.func @fc_kernel(%arg0: i32, %arg1: memref<1x32x256xf32, #tpu.memory_space<vmem>>, %arg2: memref<32x32xf32, #tpu.memory_space<vmem>>, %arg3: memref<32x1xf32, #tpu.memory_space<vmem>>, %arg4: memref<2x32xf32, #tpu.memory_space<vmem>>, %arg5: memref<32x2xf32, #tpu.memory_space<vmem>>, %arg6: memref<1x32x256xf32, #tpu.memory_space<vmem>>, %arg7: memref<32x256xf32, #tpu.memory_space<vmem>>, %arg8: memref<32x256xf32, #tpu.memory_space<vmem>>, %arg9: memref<32x2xf32, #tpu.memory_space<vmem>>) attributes {dimension_semantics = [#tpu.dimension_semantics<parallel>], iteration_bounds = array<i64: 2>, scalar_prefetch = 0 : i64, scratch_operands = 3 : i64, tpu.core_type = #tpu.core_type<tc>, window_params = [{transform_indices = @transform_0, window_bounds = array<i64: 1, 32, 256>}, {pipeline_mode = #tpu.pipeline_mode<synchronous>, transform_indices = @transform_1, window_bounds = array<i64: 32, 32>}, {pipeline_mode = #tpu.pipeline_mode<synchronous>, transform_indices = @transform_2, window_bounds = array<i64: 32, 1>}, {pipeline_mode = #tpu.pipeline_mode<synchronous>, transform_indices = @transform_3, window_bounds = array<i64: 2, 32>}, {pipeline_mode = #tpu.pipeline_mode<synchronous>, transform_indices = @transform_4, window_bounds = array<i64: 32, 2>}, {transform_indices = @transform_5, window_bounds = array<i64: 1, 32, 256>}]} {
    %c0 = arith.constant 0 : index
    %c0_0 = arith.constant 0 : index
    %c0_1 = arith.constant 0 : index
    %0 = vector.load %arg1[%c0, %c0_0, %c0_1] : memref<1x32x256xf32, #tpu.memory_space<vmem>>, vector<1x32x256xf32>
    %1 = vector.shape_cast %0 : vector<1x32x256xf32> to vector<32x256xf32>
    %c0_2 = arith.constant 0 : index
    %c0_3 = arith.constant 0 : index
    %2 = vector.load %arg7[%c0_2, %c0_3] : memref<32x256xf32, #tpu.memory_space<vmem>>, vector<32x256xf32>
    tpu.vector_store %arg7[%c0_2, %c0_3], %1 {strides = array<i32>} : memref<32x256xf32, #tpu.memory_space<vmem>>, vector<32x256xf32>,
    %c0_4 = arith.constant 0 : index
    %c0_5 = arith.constant 0 : index
    %3 = vector.load %arg2[%c0_4, %c0_5] : memref<32x32xf32, #tpu.memory_space<vmem>>, vector<32x32xf32>
    %c0_6 = arith.constant 0 : index
    %c0_7 = arith.constant 0 : index
    %4 = vector.load %arg7[%c0_6, %c0_7] : memref<32x256xf32, #tpu.memory_space<vmem>>, vector<32x256xf32>
    %cst = arith.constant dense<0.000000e+00> : vector<32x256xf32>
    %5 = tpu.matmul %3, %4, %cst {dimension_numbers = #tpu.dot_dimension_numbers<[1], [0], [0], [1], [0, 0, 1, 1], [], []>} : vector<32x32xf32>, vector<32x256xf32>, vector<32x256xf32> -> vector<32x256xf32>
    %c0_8 = arith.constant 0 : index
    %c0_9 = arith.constant 0 : index
    %6 = vector.load %arg3[%c0_8, %c0_9] : memref<32x1xf32, #tpu.memory_space<vmem>>, vector<32x1xf32>
    %7 = vector.broadcast %6 : vector<32x1xf32> to vector<32x256xf32>
    %8 = arith.addf %5, %7 : vector<32x256xf32>
    %c0_10 = arith.constant 0 : index
    %c0_11 = arith.constant 0 : index
    %9 = vector.load %arg8[%c0_10, %c0_11] : memref<32x256xf32, #tpu.memory_space<vmem>>, vector<32x256xf32>
    tpu.vector_store %arg8[%c0_10, %c0_11], %8 {strides = array<i32>} : memref<32x256xf32, #tpu.memory_space<vmem>>, vector<32x256xf32>,
    %c0_12 = arith.constant 0 : index
    %c0_13 = arith.constant 0 : index
    %10 = vector.load %arg8[%c0_12, %c0_13] : memref<32x256xf32, #tpu.memory_space<vmem>>, vector<32x256xf32>
    %cst_14 = arith.constant dense<0.000000e+00> : vector<32xf32>
    %11 = vector.multi_reduction <add>, %10, %cst_14 [1] : vector<32x256xf32> to vector<32xf32>
    %12 = vector.shape_cast %11 : vector<32xf32> to vector<32x1xf32>
    %cst_15 = arith.constant 3.906250e-03 : f32
    %13 = vector.broadcast %cst_15 : f32 to vector<32x1xf32>
    %14 = arith.mulf %12, %13 : vector<32x1xf32>
    %c0_16 = arith.constant 0 : index
    %c0_17 = arith.constant 0 : index
    %15 = vector.load %arg9[%c0_16, %c0_17] : memref<32x2xf32, #tpu.memory_space<vmem>>, vector<32x1xf32>
    tpu.vector_store %arg9[%c0_16, %c0_17], %14 {strides = array<i32>} : memref<32x2xf32, #tpu.memory_space<vmem>>, vector<32x1xf32>,
    %cst_18 = arith.constant dense<0xFF800000> : vector<32xf32>
    %16 = vector.multi_reduction <maximumf>, %10, %cst_18 [1] : vector<32x256xf32> to vector<32xf32>
    %17 = vector.shape_cast %16 : vector<32xf32> to vector<32x1xf32>
    %c0_19 = arith.constant 0 : index
    %c1 = arith.constant 1 : index
    %18 = vector.load %arg9[%c0_19, %c1] : memref<32x2xf32, #tpu.memory_space<vmem>>, vector<32x1xf32>
    tpu.vector_store %arg9[%c0_19, %c1], %17 {strides = array<i32>} : memref<32x2xf32, #tpu.memory_space<vmem>>, vector<32x1xf32>,
    %c0_20 = arith.constant 0 : index
    %c0_21 = arith.constant 0 : index
    %19 = vector.load %arg9[%c0_20, %c0_21] : memref<32x2xf32, #tpu.memory_space<vmem>>, vector<32x2xf32>
    %c0_22 = arith.constant 0 : index
    %c0_23 = arith.constant 0 : index
    %20 = vector.load %arg4[%c0_22, %c0_23] : memref<2x32xf32, #tpu.memory_space<vmem>>, vector<2x32xf32>
    %cst_24 = arith.constant dense<0.000000e+00> : vector<2x2xf32>
    %21 = tpu.matmul %20, %19, %cst_24 {dimension_numbers = #tpu.dot_dimension_numbers<[1], [0], [0], [1], [0, 0, 1, 1], [], []>} : vector<2x32xf32>, vector<32x2xf32>, vector<2x2xf32> -> vector<2x2xf32>
    %cst_25 = arith.constant 0.000000e+00 : f32
    %22 = vector.broadcast %cst_25 : f32 to vector<2x2xf32>
    %23 = arith.maximumf %21, %22 : vector<2x2xf32>
    %c0_26 = arith.constant 0 : index
    %c0_27 = arith.constant 0 : index
    %24 = vector.load %arg5[%c0_26, %c0_27] : memref<32x2xf32, #tpu.memory_space<vmem>>, vector<32x2xf32>
    %cst_28 = arith.constant dense<0.000000e+00> : vector<32x2xf32>
    %25 = tpu.matmul %24, %23, %cst_28 {dimension_numbers = #tpu.dot_dimension_numbers<[1], [0], [0], [1], [0, 0, 1, 1], [], []>} : vector<32x2xf32>, vector<2x2xf32>, vector<32x2xf32> -> vector<32x2xf32>
    %26 = vector.extract_strided_slice %25 {offsets = [0, 0], sizes = [32, 1], strides = [1, 1]} : vector<32x2xf32> to vector<32x1xf32>
    %27 = vector.extract_strided_slice %25 {offsets = [0, 1], sizes = [32, 1], strides = [1, 1]} : vector<32x2xf32> to vector<32x1xf32>
    %28 = arith.addf %26, %27 : vector<32x1xf32>
    %29 = arith.negf %28 : vector<32x1xf32>
    %30 = math.exp %29 : vector<32x1xf32>
    %cst_29 = arith.constant 1.000000e+00 : f32
    %31 = vector.broadcast %cst_29 : f32 to vector<32x1xf32>
    %32 = arith.addf %31, %30 : vector<32x1xf32>
    %33 = arith.divf %31, %32 : vector<32x1xf32>
    %c0_30 = arith.constant 0 : index
    %c0_31 = arith.constant 0 : index
    %34 = vector.load %arg8[%c0_30, %c0_31] : memref<32x256xf32, #tpu.memory_space<vmem>>, vector<32x256xf32>
    %35 = vector.broadcast %33 : vector<32x1xf32> to vector<32x256xf32>
    %36 = arith.mulf %34, %35 : vector<32x256xf32>
    %c0_32 = arith.constant 0 : index
    %c0_33 = arith.constant 0 : index
    %c0_34 = arith.constant 0 : index
    %37 = vector.load %arg1[%c0_32, %c0_33, %c0_34] : memref<1x32x256xf32, #tpu.memory_space<vmem>>, vector<1x32x256xf32>
    %38 = vector.shape_cast %37 : vector<1x32x256xf32> to vector<32x256xf32>
    %39 = arith.addf %38, %36 : vector<32x256xf32>
    %cst_35 = arith.constant 0.000000e+00 : f32
    %40 = vector.broadcast %cst_35 : f32 to vector<32x256xf32>
    %41 = arith.maximumf %39, %40 : vector<32x256xf32>
    %c0_36 = arith.constant 0 : index
    %c0_37 = arith.constant 0 : index
    %c0_38 = arith.constant 0 : index
    %42 = vector.load %arg6[%c0_36, %c0_37, %c0_38] : memref<1x32x256xf32, #tpu.memory_space<vmem>>, vector<1x32x256xf32>
    %43 = vector.shape_cast %42 : vector<1x32x256xf32> to vector<32x256xf32>
    %44 = vector.shape_cast %41 : vector<32x256xf32> to vector<1x32x256xf32>
    tpu.vector_store %arg6[%c0_36, %c0_37, %c0_38], %44 {strides = array<i32>} : memref<1x32x256xf32, #tpu.memory_space<vmem>>, vector<1x32x256xf32>,
    return
  }
  func.func @transform_0(%arg0: i32) -> (i32, i32, i32) {
    %c0_i32 = arith.constant 0 : i32
    %c0_i32_0 = arith.constant 0 : i32
    %c0_i32_1 = arith.constant 0 : i32
    return %arg0, %c0_i32, %c0_i32_0 : i32, i32, i32
  }
  func.func @transform_1(%arg0: i32) -> (i32, i32) {
    %c0_i32 = arith.constant 0 : i32
    %c0_i32_0 = arith.constant 0 : i32
    %c0_i32_1 = arith.constant 0 : i32
    return %c0_i32, %c0_i32_0 : i32, i32
  }
  func.func @transform_2(%arg0: i32) -> (i32, i32) {
    %c0_i32 = arith.constant 0 : i32
    %c0_i32_0 = arith.constant 0 : i32
    %c0_i32_1 = arith.constant 0 : i32
    return %c0_i32, %c0_i32_0 : i32, i32
  }
  func.func @transform_3(%arg0: i32) -> (i32, i32) {
    %c0_i32 = arith.constant 0 : i32
    %c0_i32_0 = arith.constant 0 : i32
    %c0_i32_1 = arith.constant 0 : i32
    return %c0_i32, %c0_i32_0 : i32, i32
  }
  func.func @transform_4(%arg0: i32) -> (i32, i32) {
    %c0_i32 = arith.constant 0 : i32
    %c0_i32_0 = arith.constant 0 : i32
    %c0_i32_1 = arith.constant 0 : i32
    return %c0_i32, %c0_i32_0 : i32, i32
  }
  func.func @transform_5(%arg0: i32) -> (i32, i32, i32) {
    %c0_i32 = arith.constant 0 : i32
    %c0_i32_0 = arith.constant 0 : i32
    %c0_i32_1 = arith.constant 0 : i32
    return %arg0, %c0_i32, %c0_i32_0 : i32, i32, i32
  }
}

</mosaic_0001>

<llo_original>
// kernel: tpu_custom_call.1
$region0: #{tpu_custom_call.1}
  #allocation0 [shape = 'u32[]', space=smem, size = 0x4, offset = 0x4, fixed_abs, tag = 'smem constant byte address 0x4 - core index']
  #allocation1 [shape = 'u32[144,128]{1,0:T(1,128)}', space=vmem, size = 0x12000, scoped, tag = 'internal scratch']
  #allocation2 [shape = 'f32[32,256]{1,0:T(8,128)}', space=vmem, size = 0x8000, scoped, tag = 'scratch operand']
  #allocation3 [shape = 'f32[32,256]{1,0:T(8,128)}', space=vmem, size = 0x8000, scoped, tag = 'scratch operand']
  #allocation4 [shape = 'f32[32,2]{1,0:T(8,128)}', space=vmem, size = 0x4000, scoped, tag = 'scratch operand']
  %s0 = inlined_call_operand.hbm [shape: f32[2,32,256], index: 0, kind: input, shape index: {}]
  %s1 = inlined_call_operand.vmem [shape: f32[32,32], index: 1, kind: input, shape index: {}]
  %s2 = inlined_call_operand.vmem [shape: f32[32,1], index: 2, kind: input, shape index: {}]
  %s3 = inlined_call_operand.vmem [shape: f32[2,32], index: 3, kind: input, shape index: {}]
  %s4 = inlined_call_operand.vmem [shape: f32[32,2], index: 4, kind: input, shape index: {}]
  %s5 = inlined_call_operand.hbm [shape: f32[2,32,256], index: 5, kind: output, shape index: {}]
  %s6 = sld [smem:[#allocation0]]
  $region57: #{tpu_custom_call.1} parent=0
    _
  %s8 = ssub.s32 1, %s6
  %s9 = scalar_select 0, %s8, %s6
  $region1: #{tpu_custom_call.1} parent=0
    #allocation5 [shape = 'u8[65536]{0}', space=vmem, size = 0x10000, scoped, tag = 'input window, operand 0']
    #allocation6 [shape = 's32[2]{0}', space=sflag, size = 0x8, scoped, tag = 'scoped memory for tpu_custom_call.1']
    #allocation7 [shape = 's32[2]{0}', space=sflag, size = 0x8, scoped, tag = 'scoped memory for tpu_custom_call.1']
    #allocation8 [shape = 'u8[65536]{0}', space=vmem, size = 0x10000, scoped, tag = 'output window, operand 0']
    %10 = vsyncpa [#allocation6], 0
    %s11 = scalar_lea.sflag [#allocation6], 1
    %12 = vsyncpa %s11, 0
    %13 = vsyncpa [#allocation7], 0
    %s14 = scalar_lea.sflag [#allocation7], 1
    %15 = vsyncpa %s14, 0
    loop: start=0, step=1, limit=4
    $region2: #{tpu_custom_call.1} parent=1 // loop_pre_header
      _
    $region3: #{tpu_custom_call.1} parent=1 // loop_header
      %s17 = sphi 0, %s21
      %p18 = scmp.ge.s32.totalorder %s17, 4
      %s27 = sphi 0, %s29
      %s30 = sphi 0, %s27
      %s31 = sphi 0, %s30
      %s47 = sphi 0, %s31
      %s51 = sphi 0, %s51
      %s53 = sphi 0, %s51
      %s54 = sphi 0, %s53
      %s68 = sphi 0, %s54
      %s72 = sphi 0, %s72
      %s74 = sphi 0, %s72
      %s75 = sphi 0, %s74
      %s89 = sphi 0, %s75
      %s93 = sphi 0, %s93
      %s95 = sphi 0, %s93
      %s96 = sphi 0, %s95
      %s110 = sphi 0, %s96
      %s114 = sphi 0, %s114
      %s116 = sphi 0, %s114
      %s117 = sphi 0, %s116
      %s131 = sphi 0, %s117
      %s137 = sphi 0, %s139
      %s140 = sphi 0, %s137
      %s141 = sphi 0, %s140
      %s157 = sphi 0, %s141
    $region4: #{tpu_custom_call.1} parent=1 // loop_header_branch
      %20 = sbr.rel (%p18) target = $region8
    $region5: #{tpu_custom_call.1} parent=1 // loop_body
      %s22 = ssub.s32 %s17, 1
      %s23 = ssub.s32 %s17, 2
      %s24 = sadd.s32 %s17, 1
      %s25 = ssub.s32 %s17, %s24
      %p26 = scmp.eq.s32.totalorder %s25, 0
      %s28 = sadd.s32 %s27, 1
      %s29 = scalar_select %p26, %s27, %s28
      %p32 = pneg %p26
      %p33 = scmp.eq.s32.totalorder %s17, 1
      %p34 = por %p32, %p33
      %p35 = scmp.ne.s32.totalorder %s27, %s30
      %p36 = scmp.eq.s32.totalorder %s17, 0
      %p37 = por %p35, %p36
      %p38 = scmp.ne.s32.totalorder %s27, %s30
      %p39 = scmp.eq.s32.totalorder %s22, 1
      %p40 = por %p38, %p39
      %p41 = scmp.ne.s32.totalorder %s30, %s31
      %p42 = scmp.eq.s32.totalorder %s22, 0
      %p43 = por %p41, %p42
      %p44 = scmp.ne.s32.totalorder %s30, %s31
      %p45 = scmp.eq.s32.totalorder %s23, 1
      %p46 = por %p44, %p45
      %p48 = scmp.ne.s32.totalorder %s31, %s47
      %p49 = scmp.eq.s32.totalorder %s23, 0
      %p50 = por %p48, %p49
      %s52 = sadd.s32 %s51, 1
      %p55 = scmp.eq.s32.totalorder %s17, 1
      %p56 = scmp.ne.s32.totalorder %s51, %s53
      %p57 = scmp.eq.s32.totalorder %s17, 0
      %p58 = por %p56, %p57
      %p59 = scmp.ne.s32.totalorder %s51, %s53
      %p60 = scmp.eq.s32.totalorder %s22, 1
      %p61 = por %p59, %p60
      %p62 = scmp.ne.s32.totalorder %s53, %s54
      %p63 = scmp.eq.s32.totalorder %s22, 0
      %p64 = por %p62, %p63
      %p65 = scmp.ne.s32.totalorder %s53, %s54
      %p66 = scmp.eq.s32.totalorder %s23, 1
      %p67 = por %p65, %p66
      %p69 = scmp.ne.s32.totalorder %s54, %s68
      %p70 = scmp.eq.s32.totalorder %s23, 0
      %p71 = por %p69, %p70
      %s73 = sadd.s32 %s72, 1
      %p76 = scmp.eq.s32.totalorder %s17, 1
      %p77 = scmp.ne.s32.totalorder %s72, %s74
      %p78 = scmp.eq.s32.totalorder %s17, 0
      %p79 = por %p77, %p78
      %p80 = scmp.ne.s32.totalorder %s72, %s74
      %p81 = scmp.eq.s32.totalorder %s22, 1
      %p82 = por %p80, %p81
      %p83 = scmp.ne.s32.totalorder %s74, %s75
      %p84 = scmp.eq.s32.totalorder %s22, 0
      %p85 = por %p83, %p84
      %p86 = scmp.ne.s32.totalorder %s74, %s75
      %p87 = scmp.eq.s32.totalorder %s23, 1
      %p88 = por %p86, %p87
      %p90 = scmp.ne.s32.totalorder %s75, %s89
      %p91 = scmp.eq.s32.totalorder %s23, 0
      %p92 = por %p90, %p91
      %s94 = sadd.s32 %s93, 1
      %p97 = scmp.eq.s32.totalorder %s17, 1
      %p98 = scmp.ne.s32.totalorder %s93, %s95
      %p99 = scmp.eq.s32.totalorder %s17, 0
      %p100 = por %p98, %p99
      %p101 = scmp.ne.s32.totalorder %s93, %s95
      %p102 = scmp.eq.s32.totalorder %s22, 1
      %p103 = por %p101, %p102
      %p104 = scmp.ne.s32.totalorder %s95, %s96
      %p105 = scmp.eq.s32.totalorder %s22, 0
      %p106 = por %p104, %p105
      %p107 = scmp.ne.s32.totalorder %s95, %s96
      %p108 = scmp.eq.s32.totalorder %s23, 1
      %p109 = por %p107, %p108
      %p111 = scmp.ne.s32.totalorder %s96, %s110
      %p112 = scmp.eq.s32.totalorder %s23, 0
      %p113 = por %p111, %p112
      %s115 = sadd.s32 %s114, 1
      %p118 = scmp.eq.s32.totalorder %s17, 1
      %p119 = scmp.ne.s32.totalorder %s114, %s116
      %p120 = scmp.eq.s32.totalorder %s17, 0
      %p121 = por %p119, %p120
      %p122 = scmp.ne.s32.totalorder %s114, %s116
      %p123 = scmp.eq.s32.totalorder %s22, 1
      %p124 = por %p122, %p123
      %p125 = scmp.ne.s32.totalorder %s116, %s117
      %p126 = scmp.eq.s32.totalorder %s22, 0
      %p127 = por %p125, %p126
      %p128 = scmp.ne.s32.totalorder %s116, %s117
      %p129 = scmp.eq.s32.totalorder %s23, 1
      %p130 = por %p128, %p129
      %p132 = scmp.ne.s32.totalorder %s117, %s131
      %p133 = scmp.eq.s32.totalorder %s23, 0
      %p134 = por %p132, %p133
      %s135 = ssub.s32 %s17, %s24
      %p136 = scmp.eq.s32.totalorder %s135, 0
      %s138 = sadd.s32 %s137, 1
      %s139 = scalar_select %p136, %s137, %s138
      %p142 = pneg %p136
      %p143 = scmp.eq.s32.totalorder %s17, 1
      %p144 = por %p142, %p143
      %p145 = scmp.ne.s32.totalorder %s137, %s140
      %p146 = scmp.eq.s32.totalorder %s17, 0
      %p147 = por %p145, %p146
      %p148 = scmp.ne.s32.totalorder %s137, %s140
      %p149 = scmp.eq.s32.totalorder %s22, 1
      %p150 = por %p148, %p149
      %p151 = scmp.ne.s32.totalorder %s140, %s141
      %p152 = scmp.eq.s32.totalorder %s22, 0
      %p153 = por %p151, %p152
      %p154 = scmp.ne.s32.totalorder %s140, %s141
      %p155 = scmp.eq.s32.totalorder %s23, 1
      %p156 = por %p154, %p155
      %p158 = scmp.ne.s32.totalorder %s141, %s157
      %p159 = scmp.eq.s32.totalorder %s23, 0
      %p160 = por %p158, %p159
      %p161 = scmp.le.s32.totalorder 1, %s17
      %p162 = scmp.lt.s32.totalorder %s17, 3
      %p163 = pnand %p161, %p162
      %p164 = pneg %p163
      // Predicated region
      $region9: #{tpu_custom_call.1} parent=5 // pred_check
        _
      $region10: #{tpu_custom_call.1} parent=5 // pred_check_branch
        %166 = sbr.rel (%p163) target = $region12
      $region11: #{tpu_custom_call.1} parent=5 // pred_region
        %s167 = ssub.s32 %s17, 1
        // Predicated region
        $region13: #{tpu_custom_call.1} parent=11 // pred_check
          %p168 = pneg %p64
        $region14: #{tpu_custom_call.1} parent=11 // pred_check_branch
          %170 = sbr.rel (%p168) target = $region16
        $region15: #{tpu_custom_call.1} parent=11 // pred_region
          _
        $region16: #{tpu_custom_call.1} parent=11 // pred_fallthru
          _
        // Predicated region
        $region17: #{tpu_custom_call.1} parent=11 // pred_check
          %p171 = pneg %p85
        $region18: #{tpu_custom_call.1} parent=11 // pred_check_branch
          %173 = sbr.rel (%p171) target = $region20
        $region19: #{tpu_custom_call.1} parent=11 // pred_region
          _
        $region20: #{tpu_custom_call.1} parent=11 // pred_fallthru
          _
        // Predicated region
        $region21: #{tpu_custom_call.1} parent=11 // pred_check
          %p174 = pneg %p106
        $region22: #{tpu_custom_call.1} parent=11 // pred_check_branch
          %176 = sbr.rel (%p174) target = $region24
        $region23: #{tpu_custom_call.1} parent=11 // pred_region
          _
        $region24: #{tpu_custom_call.1} parent=11 // pred_fallthru
          _
        // Predicated region
        $region25: #{tpu_custom_call.1} parent=11 // pred_check
          %p177 = pneg %p127
        $region26: #{tpu_custom_call.1} parent=11 // pred_check_branch
          %179 = sbr.rel (%p177) target = $region28
        $region27: #{tpu_custom_call.1} parent=11 // pred_region
          _
        $region28: #{tpu_custom_call.1} parent=11 // pred_fallthru
          _
      $region12: #{tpu_custom_call.1} parent=5 // pred_fallthru
        _
      %p180 = scmp.lt.s32.totalorder %s17, 2
      // Predicated region
      $region29: #{tpu_custom_call.1} parent=5 // pred_check
        %p181 = pneg %p180
      $region30: #{tpu_custom_call.1} parent=5 // pred_check_branch
        %183 = sbr.rel (%p181) target = $region32
      $region31: #{tpu_custom_call.1} parent=5 // pred_region
        // Predicated region
        $region33: #{tpu_custom_call.1} parent=31 // pred_check
          %p184 = pneg %p37
        $region34: #{tpu_custom_call.1} parent=31 // pred_check_branch
          %186 = sbr.rel (%p184) target = $region36
        $region35: #{tpu_custom_call.1} parent=31 // pred_region
          %s187 = sand.u32 %s27, 1
          %s188 = scalar_lea.sflag [#allocation6], %s187
          %s189 = sand.u32 %s27, 1
          %s190 = smul.addr %s189, 64
          %s191 = scalar_lea.vmem [#allocation5], %s190
          %s193 = ssub.s32 1024, 1024
          %194 = vsyncadd %s188, %s193
          %s195 = smul.addr %s17, 8
          %s196 = smul.addr %s195, 128
          %s197 = scalar_lea.hbm %s0, %s196
          %s198 = sshll.u32 %s191, 4
          %s199 = int_to_ptr.vmem [resolvable:$true] %s198
          %204 = dma.hbm_to_vmem [thread:$0]  %s197, 1024, %s199, %s188, 256, 256, 16
        $region36: #{tpu_custom_call.1} parent=31 // pred_fallthru
          _
      $region32: #{tpu_custom_call.1} parent=5 // pred_fallthru
        _
      %p205 = scmp.le.s32.totalorder 1, %s17
      %p206 = scmp.lt.s32.totalorder %s17, 3
      %p207 = pnand %p205, %p206
      %p208 = pneg %p207
      // Predicated region
      $region37: #{tpu_custom_call.1} parent=5 // pred_check
        _
      $region38: #{tpu_custom_call.1} parent=5 // pred_check_branch
        %210 = sbr.rel (%p207) target = $region40
      $region39: #{tpu_custom_call.1} parent=5 // pred_region
        %s211 = ssub.s32 %s17, 1
        %s212 = sand.u32 %s30, 1
        %s213 = scalar_lea.sflag [#allocation6], %s212
        %s214 = sand.u32 %s30, 1
        %s215 = smul.addr %s214, 64
        %s216 = scalar_lea.vmem [#allocation5], %s215
        // Predicated region
        $region41: #{tpu_custom_call.1} parent=39 // pred_check
          %p217 = pneg %p43
        $region42: #{tpu_custom_call.1} parent=39 // pred_check_branch
          %219 = sbr.rel (%p217) target = $region44
        $region43: #{tpu_custom_call.1} parent=39 // pred_region
          %220 = dma.done %s213, 1024
        $region44: #{tpu_custom_call.1} parent=39 // pred_fallthru
          _
        %s221 = sand.u32 %s30, 1
        %s222 = scalar_lea.sflag [#allocation6], %s221
        %s223 = sand.u32 %s30, 1
        %s224 = smul.addr %s223, 64
        %s225 = scalar_lea.vmem [#allocation5], %s224
        %p226 = pneg %p43
        %p227 = pneg %p40
        %p228 = pneg %p64
        %p229 = pneg %p61
        %p230 = pneg %p85
        %p231 = pneg %p82
        %p232 = pneg %p106
        %p233 = pneg %p103
        %p234 = pneg %p127
        %p235 = pneg %p124
        %p236 = pneg %p153
        %p237 = pneg %p150
        %s238 = sand.u32 %s140, 1
        %s239 = scalar_lea.sflag [#allocation7], %s238
        %s240 = sand.u32 %s140, 1
        %s241 = smul.addr %s240, 64
        %s242 = scalar_lea.vmem [#allocation8], %s241
        %v243 = vld [vmem:[%s216] sm:$0xff]
        %v244 = vld [vmem:[%s216 + $0x8] sm:$0xff]
        %v245 = vld [vmem:[%s216 + $0x10] sm:$0xff]
        %v246 = vld [vmem:[%s216 + $0x18] sm:$0xff]
        %v247 = vld [vmem:[%s216 + $0x20] sm:$0xff]
        %v248 = vld [vmem:[%s216 + $0x28] sm:$0xff]
        %v249 = vld [vmem:[%s216 + $0x30] sm:$0xff]
        %v250 = vld [vmem:[%s216 + $0x38] sm:$0xff]
        %251 = vst [vmem:[#allocation2] sm:$0xff] %v243
        %252 = vst [vmem:[#allocation2 + $0x8] sm:$0xff] %v244
        %253 = vst [vmem:[#allocation2 + $0x10] sm:$0xff] %v245
        %254 = vst [vmem:[#allocation2 + $0x18] sm:$0xff] %v246
        %255 = vst [vmem:[#allocation2 + $0x20] sm:$0xff] %v247
        %256 = vst [vmem:[#allocation2 + $0x28] sm:$0xff] %v248
        %257 = vst [vmem:[#allocation2 + $0x30] sm:$0xff] %v249
        %258 = vst [vmem:[#allocation2 + $0x38] sm:$0xff] %v250
        %v259 = vld [vmem:[%s1] sm:$0xff]
        %v260 = vld [vmem:[%s1 + $0x8] sm:$0xff]
        %v261 = vld [vmem:[%s1 + $0x10] sm:$0xff]
        %v262 = vld [vmem:[%s1 + $0x18] sm:$0xff]
        %v263 = vld [vmem:[#allocation2] sm:$0xff]
        %v264 = vld [vmem:[#allocation2 + $0x8] sm:$0xff]
        %v265 = vld [vmem:[#allocation2 + $0x10] sm:$0xff]
        %v266 = vld [vmem:[#allocation2 + $0x18] sm:$0xff]
        %v267 = vld [vmem:[#allocation2 + $0x20] sm:$0xff]
        %v268 = vld [vmem:[#allocation2 + $0x28] sm:$0xff]
        %v269 = vld [vmem:[#allocation2 + $0x30] sm:$0xff]
        %v270 = vld [vmem:[#allocation2 + $0x38] sm:$0xff]
        %v271 = vld [vmem:[%s2] sm:$0xff]
        %v272 = vld [vmem:[%s2 + $0x8] sm:$0xff]
        %v273 = vld [vmem:[%s2 + $0x10] sm:$0xff]
        %v274 = vld [vmem:[%s2 + $0x18] sm:$0xff]
        %276 = vset.pattern.permute.xlu0 0
        %277 = vperm.xlu0 %276, %v271
        %v278 = vpop.permute.xlu0 %277
        %281 = vset.pattern.permute.xlu0 0
        %282 = vperm.xlu0 %281, %v272
        %v283 = vpop.permute.xlu0 %282
        %286 = vset.pattern.permute.xlu0 0
        %287 = vperm.xlu0 %286, %v273
        %v288 = vpop.permute.xlu0 %287
        %291 = vset.pattern.permute.xlu0 0
        %292 = vperm.xlu0 %291, %v274
        %v293 = vpop.permute.xlu0 %292
        %vm295 = vcmask 261120
        %v297 = vsel %vm295, %v259, 0
        %v300 = vsel %vm295, %v260, 0
        %v303 = vsel %vm295, %v261, 0
        %v306 = vsel %vm295, %v262, 0
        %308 = vmatprep.subr.mxu0 %v264
        %309 = vmatpush1.msra.mxu0 %v263
        %310 = vmatprep.subr.mxu0 %v266
        %311 = vmatpush1.msra.mxu0 %v265
        %312 = vmatprep.subr.mxu0 %v268
        %313 = vmatpush1.msra.mxu0 %v267
        %314 = vmatprep.subr.mxu0 %v270
        %315 = vmatpush1.msra.mxu0 %v269
        %316 = vmatprep.subr.mxu0 0.0
        %317 = vmatpush1.msra.mxu0 0.0
        %318 = vmatprep.subr.mxu0 0.0
        %319 = vmatpush1.msra.mxu0 0.0
        %320 = vmatprep.subr.mxu0 0.0
        %321 = vmatpush1.msra.mxu0 0.0
        %322 = vmatprep.subr.mxu0 0.0
        %323 = vmatpush1.msra.mxu0 0.0
        %324 = vmatprep.subr.mxu0 0.0
        %325 = vmatpush1.msra.mxu0 0.0
        %326 = vmatprep.subr.mxu0 0.0
        %327 = vmatpush1.msra.mxu0 0.0
        %328 = vmatprep.subr.mxu0 0.0
        %329 = vmatpush1.msra.mxu0 0.0
        %330 = vmatprep.subr.mxu0 0.0
        %331 = vmatpush1.msra.mxu0 0.0
        %332 = vmatprep.subr.mxu0 0.0
        %333 = vmatpush1.msra.mxu0 0.0
        %334 = vmatprep.subr.mxu0 0.0
        %335 = vmatpush1.msra.mxu0 0.0
        %336 = vmatprep.subr.mxu0 0.0
        %337 = vmatpush1.msra.mxu0 0.0
        %338 = vmatprep.subr.mxu0 0.0
        %339 = vmatpush1.msra.mxu0 0.0
        %340 = vmatprep.subr.mxu0 0.0
        %341 = vmatpush1.msra.mxu0 0.0
        %342 = vmatprep.subr.mxu0 0.0
        %343 = vmatpush1.msra.mxu0 0.0
        %344 = vmatprep.subr.mxu0 0.0
        %345 = vmatpush1.msra.mxu0 0.0
        %346 = vmatprep.subr.mxu0 0.0
        %347 = vmatpush1.msra.mxu0 0.0
        %348 = vmatprep.subr.mxu0 0.0
        %349 = vmatpush1.msra.mxu0 0.0
        %350 = vmatprep.subr.mxu0 0.0
        %351 = vmatpush1.msra.mxu0 0.0
        %352 = vmatprep.subr.mxu0 0.0
        %353 = vmatpush1.msra.mxu0 0.0
        %354 = vmatprep.subr.mxu0 0.0
        %355 = vmatpush1.msra.mxu0 0.0
        %356 = vmatprep.subr.mxu0 0.0
        %357 = vmatpush1.msra.mxu0 0.0
        %358 = vmatprep.subr.mxu0 0.0
        %359 = vmatpush1.msra.mxu0 0.0
        %360 = vmatprep.subr.mxu0 0.0
        %361 = vmatpush1.msra.mxu0 0.0
        %362 = vmatprep.subr.mxu0 0.0
        %363 = vmatpush1.msra.mxu0 0.0
        %364 = vmatprep.subr.mxu0 0.0
        %365 = vmatpush1.msra.mxu0 0.0
        %366 = vmatprep.subr.mxu0 0.0
        %367 = vmatpush1.msra.mxu0 0.0
        %368 = vmatprep.subr.mxu0 0.0
        %369 = vmatpush1.msra.mxu0 0.0
        %370 = vmatprep.subr.mxu0 0.0
        %371 = vmatpush1.msra.mxu0 0.0
        %372 = vmatprep.mubr.f32.mxu0 0.0
        %373 = vmatmul.mubr.f32.gmra.mrb[0].mxu0 %v297
        %v374 = vpop.f32.mrb[0].mxu0
        %v375 = vadd.f32 %v278, %v374
        %v376 = vpop.f32.mrb[0].mxu0
        %v377 = vadd.f32 %v278, %v376
        %378 = vmatprep.mubr.f32.mxu0 0.0
        %379 = vmatmul.mubr.f32.gmra.mrb[0].mxu0 %v300
        %v380 = vpop.f32.mrb[0].mxu0
        %v381 = vadd.f32 %v283, %v380
        %v382 = vpop.f32.mrb[0].mxu0
        %v383 = vadd.f32 %v283, %v382
        %384 = vmatprep.mubr.f32.mxu0 0.0
        %385 = vmatmul.mubr.f32.gmra.mrb[0].mxu0 %v303
        %v386 = vpop.f32.mrb[0].mxu0
        %v387 = vadd.f32 %v288, %v386
        %v388 = vpop.f32.mrb[0].mxu0
        %v389 = vadd.f32 %v288, %v388
        %390 = vmatprep.mubr.f32.mxu0 0.0
        %391 = vmatmul.mubr.f32.gmra.mrb[0].mxu0 %v306
        %v392 = vpop.f32.mrb[0].mxu0
        %v393 = vadd.f32 %v293, %v392
        %v394 = vpop.f32.mrb[0].mxu0
        %v395 = vadd.f32 %v293, %v394
        %396 = vdwg.mxu0
        %397 = vst [vmem:[#allocation3] sm:$0xff] %v375
        %398 = vst [vmem:[#allocation3 + $0x8] sm:$0xff] %v377
        %399 = vst [vmem:[#allocation3 + $0x10] sm:$0xff] %v381
        %400 = vst [vmem:[#allocation3 + $0x18] sm:$0xff] %v383
        %401 = vst [vmem:[#allocation3 + $0x20] sm:$0xff] %v387
        %402 = vst [vmem:[#allocation3 + $0x28] sm:$0xff] %v389
        %403 = vst [vmem:[#allocation3 + $0x30] sm:$0xff] %v393
        %404 = vst [vmem:[#allocation3 + $0x38] sm:$0xff] %v395
        %v405 = vld [vmem:[#allocation3] sm:$0xff]
        %v406 = vld [vmem:[#allocation3 + $0x8] sm:$0xff]
        %v407 = vld [vmem:[#allocation3 + $0x10] sm:$0xff]
        %v408 = vld [vmem:[#allocation3 + $0x18] sm:$0xff]
        %v409 = vld [vmem:[#allocation3 + $0x20] sm:$0xff]
        %v410 = vld [vmem:[#allocation3 + $0x28] sm:$0xff]
        %v411 = vld [vmem:[#allocation3 + $0x30] sm:$0xff]
        %v412 = vld [vmem:[#allocation3 + $0x38] sm:$0xff]
        %v413 = vadd.f32 %v405, %v406
        %414 = vadd.xlane.f32.xlu0 %v413
        %v415 = vpop.xlane.xlu0 %414
        %v416 = vadd.f32 %v407, %v408
        %417 = vadd.xlane.f32.xlu0 %v416
        %v418 = vpop.xlane.xlu0 %417
        %v419 = vadd.f32 %v409, %v410
        %420 = vadd.xlane.f32.xlu0 %v419
        %v421 = vpop.xlane.xlu0 %420
        %v422 = vadd.f32 %v411, %v412
        %423 = vadd.xlane.f32.xlu0 %v422
        %v424 = vpop.xlane.xlu0 %423
        %v425 = vmul.f32 %v415, 0.00390625
        %v426 = vmul.f32 %v418, 0.00390625
        %v427 = vmul.f32 %v421, 0.00390625
        %v428 = vmul.f32 %v424, 0.00390625
        %vm429 = vcmask 7168
        %430 = vst.msk [vmem:[#allocation4] sm:$0xff] %vm429, %v425
        %431 = vst.msk [vmem:[#allocation4 + $0x8] sm:$0xff] %vm429, %v426
        %432 = vst.msk [vmem:[#allocation4 + $0x10] sm:$0xff] %vm429, %v427
        %433 = vst.msk [vmem:[#allocation4 + $0x18] sm:$0xff] %vm429, %v428
        %v434 = vmax.f32 %v405, %v406
        %435 = vmax.xlane.f32.xlu0 %v434
        %v436 = vpop.xlane.xlu0 %435
        %v437 = vmax.f32 %v407, %v408
        %438 = vmax.xlane.f32.xlu0 %v437
        %v439 = vpop.xlane.xlu0 %438
        %v440 = vmax.f32 %v409, %v410
        %441 = vmax.xlane.f32.xlu0 %v440
        %v442 = vpop.xlane.xlu0 %441
        %v443 = vmax.f32 %v411, %v412
        %444 = vmax.xlane.f32.xlu0 %v443
        %v445 = vpop.xlane.xlu0 %444
        %vm446 = vcmask 15368
        %447 = vst.msk [vmem:[#allocation4] sm:$0xff] %vm446, %v436
        %448 = vst.msk [vmem:[#allocation4 + $0x8] sm:$0xff] %vm446, %v439
        %449 = vst.msk [vmem:[#allocation4 + $0x10] sm:$0xff] %vm446, %v442
        %450 = vst.msk [vmem:[#allocation4 + $0x18] sm:$0xff] %vm446, %v445
        %v451 = vld [vmem:[#allocation4] sm:$0xff]
        %v452 = vld [vmem:[#allocation4 + $0x8] sm:$0xff]
        %v453 = vld [vmem:[#allocation4 + $0x10] sm:$0xff]
        %v454 = vld [vmem:[#allocation4 + $0x18] sm:$0xff]
        %v455 = vld [vmem:[%s3] sm:$0x3]
        %v457 = vsel %vm295, %v455, 0
        %459 = vmatprep.subr.mxu0 0.0
        %460 = vmatpush1.msra.mxu0 %v451
        %461 = vmatprep.subr.mxu0 0.0
        %462 = vmatpush1.msra.mxu0 %v452
        %463 = vmatprep.subr.mxu0 0.0
        %464 = vmatpush1.msra.mxu0 %v453
        %465 = vmatprep.subr.mxu0 0.0
        %466 = vmatpush1.msra.mxu0 %v454
        %467 = vmatprep.subr.mxu0 0.0
        %468 = vmatpush1.msra.mxu0 0.0
        %469 = vmatprep.subr.mxu0 0.0
        %470 = vmatpush1.msra.mxu0 0.0
        %471 = vmatprep.subr.mxu0 0.0
        %472 = vmatpush1.msra.mxu0 0.0
        %473 = vmatprep.subr.mxu0 0.0
        %474 = vmatpush1.msra.mxu0 0.0
        %475 = vmatprep.subr.mxu0 0.0
        %476 = vmatpush1.msra.mxu0 0.0
        %477 = vmatprep.subr.mxu0 0.0
        %478 = vmatpush1.msra.mxu0 0.0
        %479 = vmatprep.subr.mxu0 0.0
        %480 = vmatpush1.msra.mxu0 0.0
        %481 = vmatprep.subr.mxu0 0.0
        %482 = vmatpush1.msra.mxu0 0.0
        %483 = vmatprep.subr.mxu0 0.0
        %484 = vmatpush1.msra.mxu0 0.0
        %485 = vmatprep.subr.mxu0 0.0
        %486 = vmatpush1.msra.mxu0 0.0
        %487 = vmatprep.subr.mxu0 0.0
        %488 = vmatpush1.msra.mxu0 0.0
        %489 = vmatprep.subr.mxu0 0.0
        %490 = vmatpush1.msra.mxu0 0.0
        %491 = vmatprep.subr.mxu0 0.0
        %492 = vmatpush1.msra.mxu0 0.0
        %493 = vmatprep.subr.mxu0 0.0
        %494 = vmatpush1.msra.mxu0 0.0
        %495 = vmatprep.subr.mxu0 0.0
        %496 = vmatpush1.msra.mxu0 0.0
        %497 = vmatprep.subr.mxu0 0.0
        %498 = vmatpush1.msra.mxu0 0.0
        %499 = vmatprep.subr.mxu0 0.0
        %500 = vmatpush1.msra.mxu0 0.0
        %501 = vmatprep.subr.mxu0 0.0
        %502 = vmatpush1.msra.mxu0 0.0
        %503 = vmatprep.subr.mxu0 0.0
        %504 = vmatpush1.msra.mxu0 0.0
        %505 = vmatprep.subr.mxu0 0.0
        %506 = vmatpush1.msra.mxu0 0.0
        %507 = vmatprep.subr.mxu0 0.0
        %508 = vmatpush1.msra.mxu0 0.0
        %509 = vmatprep.subr.mxu0 0.0
        %510 = vmatpush1.msra.mxu0 0.0
        %511 = vmatprep.subr.mxu0 0.0
        %512 = vmatpush1.msra.mxu0 0.0
        %513 = vmatprep.subr.mxu0 0.0
        %514 = vmatpush1.msra.mxu0 0.0
        %515 = vmatprep.subr.mxu0 0.0
        %516 = vmatpush1.msra.mxu0 0.0
        %517 = vmatprep.subr.mxu0 0.0
        %518 = vmatpush1.msra.mxu0 0.0
        %519 = vmatprep.subr.mxu0 0.0
        %520 = vmatpush1.msra.mxu0 0.0
        %521 = vmatprep.subr.mxu0 0.0
        %522 = vmatpush1.msra.mxu0 0.0
        %523 = vmatprep.mubr.f32.mxu0 0.0
        %524 = vmatmul.mubr.f32.gmra.mrb[0].mxu0 %v457
        %v525 = vpop.f32.mrb[0].mxu0
        %v526 = vadd.f32 0.0, %v525
        %v527 = vpop.f32.mrb[0].mxu0
        %528 = vdwg.mxu0
        %v529 = vmax.f32 %v526, 0.0
        %v530 = vld [vmem:[%s4] sm:$0xff]
        %v531 = vld [vmem:[%s4 + $0x8] sm:$0xff]
        %v532 = vld [vmem:[%s4 + $0x10] sm:$0xff]
        %v533 = vld [vmem:[%s4 + $0x18] sm:$0xff]
        %vm534 = vcmask 15360
        %v536 = vsel %vm534, %v530, 0
        %v539 = vsel %vm534, %v531, 0
        %v542 = vsel %vm534, %v532, 0
        %v545 = vsel %vm534, %v533, 0
        %vm547 = vcmask 1041408
        %v549 = vsel %vm547, %v529, 0
        %551 = vmatprep.subr.mxu0 0.0
        %552 = vmatpush1.msra.mxu0 %v549
        %553 = vmatprep.subr.mxu0 0.0
        %554 = vmatpush1.msra.mxu0 0.0
        %555 = vmatprep.subr.mxu0 0.0
        %556 = vmatpush1.msra.mxu0 0.0
        %557 = vmatprep.subr.mxu0 0.0
        %558 = vmatpush1.msra.mxu0 0.0
        %559 = vmatprep.subr.mxu0 0.0
        %560 = vmatpush1.msra.mxu0 0.0
        %561 = vmatprep.subr.mxu0 0.0
        %562 = vmatpush1.msra.mxu0 0.0
        %563 = vmatprep.subr.mxu0 0.0
        %564 = vmatpush1.msra.mxu0 0.0
        %565 = vmatprep.subr.mxu0 0.0
        %566 = vmatpush1.msra.mxu0 0.0
        %567 = vmatprep.subr.mxu0 0.0
        %568 = vmatpush1.msra.mxu0 0.0
        %569 = vmatprep.subr.mxu0 0.0
        %570 = vmatpush1.msra.mxu0 0.0
        %571 = vmatprep.subr.mxu0 0.0
        %572 = vmatpush1.msra.mxu0 0.0
        %573 = vmatprep.subr.mxu0 0.0
        %574 = vmatpush1.msra.mxu0 0.0
        %575 = vmatprep.subr.mxu0 0.0
        %576 = vmatpush1.msra.mxu0 0.0
        %577 = vmatprep.subr.mxu0 0.0
        %578 = vmatpush1.msra.mxu0 0.0
        %579 = vmatprep.subr.mxu0 0.0
        %580 = vmatpush1.msra.mxu0 0.0
        %581 = vmatprep.subr.mxu0 0.0
        %582 = vmatpush1.msra.mxu0 0.0
        %583 = vmatprep.subr.mxu0 0.0
        %584 = vmatpush1.msra.mxu0 0.0
        %585 = vmatprep.subr.mxu0 0.0
        %586 = vmatpush1.msra.mxu0 0.0
        %587 = vmatprep.subr.mxu0 0.0
        %588 = vmatpush1.msra.mxu0 0.0
        %589 = vmatprep.subr.mxu0 0.0
        %590 = vmatpush1.msra.mxu0 0.0
        %591 = vmatprep.subr.mxu0 0.0
        %592 = vmatpush1.msra.mxu0 0.0
        %593 = vmatprep.subr.mxu0 0.0
        %594 = vmatpush1.msra.mxu0 0.0
        %595 = vmatprep.subr.mxu0 0.0
        %596 = vmatpush1.msra.mxu0 0.0
        %597 = vmatprep.subr.mxu0 0.0
        %598 = vmatpush1.msra.mxu0 0.0
        %599 = vmatprep.subr.mxu0 0.0
        %600 = vmatpush1.msra.mxu0 0.0
        %601 = vmatprep.subr.mxu0 0.0
        %602 = vmatpush1.msra.mxu0 0.0
        %603 = vmatprep.subr.mxu0 0.0
        %604 = vmatpush1.msra.mxu0 0.0
        %605 = vmatprep.subr.mxu0 0.0
        %606 = vmatpush1.msra.mxu0 0.0
        %607 = vmatprep.subr.mxu0 0.0
        %608 = vmatpush1.msra.mxu0 0.0
        %609 = vmatprep.subr.mxu0 0.0
        %610 = vmatpush1.msra.mxu0 0.0
        %611 = vmatprep.subr.mxu0 0.0
        %612 = vmatpush1.msra.mxu0 0.0
        %613 = vmatprep.subr.mxu0 0.0
        %614 = vmatpush1.msra.mxu0 0.0
        %615 = vmatprep.mubr.f32.mxu0 0.0
        %616 = vmatmul.mubr.f32.gmra.mrb[0].mxu0 %v536
        %v617 = vpop.f32.mrb[0].mxu0
        %v618 = vadd.f32 0.0, %v617
        %v619 = vpop.f32.mrb[0].mxu0
        %620 = vmatprep.mubr.f32.mxu0 0.0
        %621 = vmatmul.mubr.f32.gmra.mrb[0].mxu0 %v539
        %v622 = vpop.f32.mrb[0].mxu0
        %v623 = vadd.f32 0.0, %v622
        %v624 = vpop.f32.mrb[0].mxu0
        %625 = vmatprep.mubr.f32.mxu0 0.0
        %626 = vmatmul.mubr.f32.gmra.mrb[0].mxu0 %v542
        %v627 = vpop.f32.mrb[0].mxu0
        %v628 = vadd.f32 0.0, %v627
        %v629 = vpop.f32.mrb[0].mxu0
        %630 = vmatprep.mubr.f32.mxu0 0.0
        %631 = vmatmul.mubr.f32.gmra.mrb[0].mxu0 %v545
        %v632 = vpop.f32.mrb[0].mxu0
        %v633 = vadd.f32 0.0, %v632
        %v634 = vpop.f32.mrb[0].mxu0
        %635 = vdwg.mxu0
        %640 = vrot.lane.b32.xlu0 %v618, 127
        %v641 = vpop.permute.xlu0 %640
        %642 = vrot.lane.b32.xlu0 %v623, 127
        %v643 = vpop.permute.xlu0 %642
        %644 = vrot.lane.b32.xlu0 %v628, 127
        %v645 = vpop.permute.xlu0 %644
        %646 = vrot.lane.b32.xlu0 %v633, 127
        %v647 = vpop.permute.xlu0 %646
        %v652 = vadd.f32 %v618, %v641
        %v653 = vadd.f32 %v623, %v643
        %v654 = vadd.f32 %v628, %v645
        %v655 = vadd.f32 %v633, %v647
        %v656 = vxor.u32 %v652, 2147483648
        %v657 = vxor.u32 %v653, 2147483648
        %v658 = vxor.u32 %v654, 2147483648
        %v659 = vxor.u32 %v655, 2147483648
        %v660 = vmul.f32 %v656, 1.442695
        %v661 = vpow.pop %v660
        %v662 = vmul.f32 %v657, 1.442695
        %v663 = vpow.pop %v662
        %v664 = vmul.f32 %v658, 1.442695
        %v665 = vpow.pop %v664
        %v666 = vmul.f32 %v659, 1.442695
        %v667 = vpow.pop %v666
        %v668 = vadd.f32 %v661, 1.0
        %v669 = vadd.f32 %v663, 1.0
        %v670 = vadd.f32 %v665, 1.0
        %v671 = vadd.f32 %v667, 1.0
        %v672 = vrcp.pop %v668
        %v673 = vmul.f32 1.0, %v672
        %v674 = vrcp.pop %v669
        %v675 = vmul.f32 1.0, %v674
        %v676 = vrcp.pop %v670
        %v677 = vmul.f32 1.0, %v676
        %v678 = vrcp.pop %v671
        %v679 = vmul.f32 1.0, %v678
        %v680 = vld [vmem:[#allocation3] sm:$0xff]
        %v681 = vld [vmem:[#allocation3 + $0x8] sm:$0xff]
        %v682 = vld [vmem:[#allocation3 + $0x10] sm:$0xff]
        %v683 = vld [vmem:[#allocation3 + $0x18] sm:$0xff]
        %v684 = vld [vmem:[#allocation3 + $0x20] sm:$0xff]
        %v685 = vld [vmem:[#allocation3 + $0x28] sm:$0xff]
        %v686 = vld [vmem:[#allocation3 + $0x30] sm:$0xff]
        %v687 = vld [vmem:[#allocation3 + $0x38] sm:$0xff]
        %689 = vset.pattern.permute.xlu0 0
        %690 = vperm.xlu0 %689, %v673
        %v691 = vpop.permute.xlu0 %690
        %694 = vset.pattern.permute.xlu0 0
        %695 = vperm.xlu0 %694, %v675
        %v696 = vpop.permute.xlu0 %695
        %699 = vset.pattern.permute.xlu0 0
        %700 = vperm.xlu0 %699, %v677
        %v701 = vpop.permute.xlu0 %700
        %704 = vset.pattern.permute.xlu0 0
        %705 = vperm.xlu0 %704, %v679
        %v706 = vpop.permute.xlu0 %705
        %v708 = vmul.f32 %v680, %v691
        %v709 = vmul.f32 %v681, %v691
        %v710 = vmul.f32 %v682, %v696
        %v711 = vmul.f32 %v683, %v696
        %v712 = vmul.f32 %v684, %v701
        %v713 = vmul.f32 %v685, %v701
        %v714 = vmul.f32 %v686, %v706
        %v715 = vmul.f32 %v687, %v706
        %v716 = vld [vmem:[%s216] sm:$0xff]
        %v717 = vld [vmem:[%s216 + $0x8] sm:$0xff]
        %v718 = vld [vmem:[%s216 + $0x10] sm:$0xff]
        %v719 = vld [vmem:[%s216 + $0x18] sm:$0xff]
        %v720 = vld [vmem:[%s216 + $0x20] sm:$0xff]
        %v721 = vld [vmem:[%s216 + $0x28] sm:$0xff]
        %v722 = vld [vmem:[%s216 + $0x30] sm:$0xff]
        %v723 = vld [vmem:[%s216 + $0x38] sm:$0xff]
        %v724 = vadd.f32 %v716, %v708
        %v725 = vadd.f32 %v717, %v709
        %v726 = vadd.f32 %v718, %v710
        %v727 = vadd.f32 %v719, %v711
        %v728 = vadd.f32 %v720, %v712
        %v729 = vadd.f32 %v721, %v713
        %v730 = vadd.f32 %v722, %v714
        %v731 = vadd.f32 %v723, %v715
        %v732 = vmax.f32 %v724, 0.0
        %v733 = vmax.f32 %v725, 0.0
        %v734 = vmax.f32 %v726, 0.0
        %v735 = vmax.f32 %v727, 0.0
        %v736 = vmax.f32 %v728, 0.0
        %v737 = vmax.f32 %v729, 0.0
        %v738 = vmax.f32 %v730, 0.0
        %v739 = vmax.f32 %v731, 0.0
        %740 = vst [vmem:[%s242] sm:$0xff] %v732
        %741 = vst [vmem:[%s242 + $0x8] sm:$0xff] %v733
        %742 = vst [vmem:[%s242 + $0x10] sm:$0xff] %v734
        %743 = vst [vmem:[%s242 + $0x18] sm:$0xff] %v735
        %744 = vst [vmem:[%s242 + $0x20] sm:$0xff] %v736
        %745 = vst [vmem:[%s242 + $0x28] sm:$0xff] %v737
        %746 = vst [vmem:[%s242 + $0x30] sm:$0xff] %v738
        %747 = vst [vmem:[%s242 + $0x38] sm:$0xff] %v739
        %s748 = sand.u32 %s140, 1
        %s749 = scalar_lea.sflag [#allocation7], %s748
        %s750 = sand.u32 %s140, 1
        %s751 = smul.addr %s750, 64
        %s752 = scalar_lea.vmem [#allocation8], %s751
        // Predicated region
        $region45: #{tpu_custom_call.1} parent=39 // pred_check
          %p753 = pneg %p150
        $region46: #{tpu_custom_call.1} parent=39 // pred_check_branch
          %755 = sbr.rel (%p753) target = $region48
        $region47: #{tpu_custom_call.1} parent=39 // pred_region
          %s757 = ssub.s32 1024, 1024
          %758 = vsyncadd %s749, %s757
          %s759 = smul.addr %s22, 8
          %s760 = smul.addr %s759, 128
          %s761 = scalar_lea.hbm %s5, %s760
          %s762 = sshll.u32 %s752, 4
          %s763 = int_to_ptr.vmem [resolvable:$true] %s762
          %768 = dma.vmem_to_hbm [thread:$0]  %s763, 1024, %s761, %s749, 256, 256, 16
        $region48: #{tpu_custom_call.1} parent=39 // pred_fallthru
          _
      $region40: #{tpu_custom_call.1} parent=5 // pred_fallthru
        _
      %p769 = scmp.le.s32.totalorder 2, %s17
      // Predicated region
      $region49: #{tpu_custom_call.1} parent=5 // pred_check
        %p770 = pneg %p769
      $region50: #{tpu_custom_call.1} parent=5 // pred_check_branch
        %772 = sbr.rel (%p770) target = $region52
      $region51: #{tpu_custom_call.1} parent=5 // pred_region
        %s773 = ssub.s32 %s17, 2
        // Predicated region
        $region53: #{tpu_custom_call.1} parent=51 // pred_check
          %p774 = pneg %p156
        $region54: #{tpu_custom_call.1} parent=51 // pred_check_branch
          %776 = sbr.rel (%p774) target = $region56
        $region55: #{tpu_custom_call.1} parent=51 // pred_region
          %s777 = sand.u32 %s141, 1
          %s778 = scalar_lea.sflag [#allocation7], %s777
          %s779 = sand.u32 %s141, 1
          %s780 = smul.addr %s779, 64
          %s781 = scalar_lea.vmem [#allocation8], %s780
          %782 = dma.done %s778, 1024
        $region56: #{tpu_custom_call.1} parent=51 // pred_fallthru
          _
      $region52: #{tpu_custom_call.1} parent=5 // pred_fallthru
        _
    $region6: #{tpu_custom_call.1} parent=1 // loop_footer
      %s21 = sadd.s32 1, %s17
    $region7: #{tpu_custom_call.1} parent=1 // loop_footer_branch
      %16 = sbr.rel target = $region3
    $region8: #{tpu_custom_call.1} parent=1 // loop_exit
      _
    %783 = vsyncpa [#allocation6], 1
    %s784 = scalar_lea.sflag [#allocation6], 1
    %785 = vsyncpa %s784, 1
    %786 = vsyncpa [#allocation7], 1
    %s787 = scalar_lea.sflag [#allocation7], 1
    %788 = vsyncpa %s787, 1

</llo_original>
